<compile_context>
chip_gen: v6e
topology: v6e:2x2x1
jax: 0.10.0
libtpu: 0.0.40
codegen_flags: <defaults>
</compile_context>

<pallas_src>
import functools

import jax
import jax.numpy as jnp
from jax.experimental import pallas as pl
from jax.experimental.pallas import tpu as pltpu


# ------------------------- Pallas kernel -------------------------

def _widedeep_kernel(x_ref, w1_ref, b1_ref, w2_ref, b2_ref,
                     wfw_ref, wfd_ref, bf_ref, out_ref, *, w_rows, d_rows):
    # x_ref: (w_rows + d_rows, tb) bf16, batch on the lane axis.  Slices are
    # static and start on sublane-tile (multiple-of-8) boundaries.
    wide = x_ref[0:w_rows, :].astype(jnp.float32)                 # (Wp, tb)
    deep = x_ref[w_rows:w_rows + d_rows, :].astype(jnp.float32)   # (Dp, tb)

    # Deep tower with inference BatchNorm folded into (w, b): relu(W x + b).
    h1 = jnp.dot(w1_ref[...], deep, preferred_element_type=jnp.float32)
    h1 = jnp.maximum(h1 + b1_ref[...], 0.0)                       # (H1, tb)
    h2 = jnp.dot(w2_ref[...], h1, preferred_element_type=jnp.float32)
    h2 = jnp.maximum(h2 + b2_ref[...], 0.0)                       # (H2, tb)

    # Final linear (output width 1): VPU multiply + sublane (XLU) reduce
    # instead of two N=1 MXU matmuls; result is lane-dense (1, tb).
    logit = (jnp.sum(wide * wfw_ref[...], axis=0, keepdims=True)
             + jnp.sum(h2 * wfd_ref[...], axis=0, keepdims=True)
             + bf_ref[...])                                       # (1, tb)

    # Sigmoid: exp (EUP) + approx EUP reciprocal.
    out_ref[...] = pl.reciprocal(1.0 + jnp.exp(-logit), approx=True)


# ------------------------- wrapper -------------------------

def _round_up(x, m):
    return (x + m - 1) // m * m


def _fold_batchnorm(p, eps=1e-5):
    """Fold inference-form BatchNorm into the preceding Linear's (w, b)."""
    s1 = p["g1"] * jax.lax.rsqrt(p["v1"] + eps)            # (1, H1)
    w1f = p["w1"] * s1                                      # (D, H1)
    b1f = (p["b1"] - p["m1"]) * s1 + p["be1"]               # (1, H1)
    s2 = p["g2"] * jax.lax.rsqrt(p["v2"] + eps)
    w2f = p["w2"] * s2                                      # (H1, H2)
    b2f = (p["b2"] - p["m2"]) * s2 + p["be2"]               # (1, H2)
    return w1f, b1f, w2f, b2f


def widedeep_pallas(wide_cross, deep_cat, params, *, batch_tile=None,
                    activation_dtype=jnp.bfloat16):
    """wide_cross: (B, W) f32, deep_cat: (B, D) f32  ->  (B, 1) f32 sigmoid."""
    B, W = wide_cross.shape
    _, D = deep_cat.shape
    H1 = params["w1"].shape[1]
    H2 = params["w2"].shape[1]
    assert params["wf_wide"].shape[1] == 1, "kernel assumes output_size == 1"

    if batch_tile is None:
        # Lane-aligned batch tile; 2048 amortizes per-step overhead while the
        # per-step VMEM footprint stays tiny (lane-major bf16 slab of
        # (W_pad+D_pad, tb) + (1, tb) f32 output, double-buffered).
        batch_tile = min(2048, _round_up(B, 128))
    assert batch_tile % 128 == 0, "batch_tile must be a multiple of 128"

    B_pad = _round_up(B, batch_tile)        # remainder handled by zero-padding
    n_tiles = B_pad // batch_tile

    # Pad feature counts to sublane multiples of 8 so every block is
    # (8,128)-tile aligned (no masked sublane reductions / matmul edges).
    W_pad = _round_up(W, 8)
    D_pad = _round_up(D, 8)

    # Fold BatchNorm, transpose weights so batch sits on the lane axis.
    w1f, b1f, w2f, b2f = _fold_batchnorm(params)
    w1k = jnp.pad(w1f.T, ((0, 0), (0, D_pad - D)))          # (H1, D_pad)
    b1k = b1f.reshape(H1, 1)                                 # (H1, 1)
    w2k = w2f.T                                              # (H2, H1)
    b2k = b2f.reshape(H2, 1)                                 # (H2, 1)
    wfw = jnp.pad(params["wf_wide"], ((0, W_pad - W), (0, 0)))  # (W_pad, 1)
    wfd = params["wf_deep"]                                  # (H2, 1)
    bf = params["bf"].reshape(1, 1)                          # (1, 1)

    # Lane-major (feature-on-sublane, batch-on-lane) bf16 activation slab;
    # wide and deep stacked so each grid step needs a single input DMA.
    def lane_major(x, rows_pad):
        x = jnp.pad(x, ((0, B_pad - B), (0, rows_pad - x.shape[1])))
        return x.T.astype(activation_dtype)

    x_slab = jnp.concatenate([lane_major(wide_cross, W_pad),
                              lane_major(deep_cat, D_pad)], axis=0)
    rows = W_pad + D_pad                                     # (rows, B_pad)

    slab_spec = pl.BlockSpec((rows, batch_tile), lambda i: (0, i))

    def const_spec(arr):
        # Constant block index -> fetched once, reused across grid steps.
        return pl.BlockSpec(arr.shape, lambda i: (0, 0))

    param_args = [w1k, b1k, w2k, b2k, wfw, wfd, bf]

    kernel = functools.partial(_widedeep_kernel, w_rows=W_pad, d_rows=D_pad)

    out = pl.pallas_call(
        kernel,
        out_shape=jax.ShapeDtypeStruct((1, B_pad), jnp.float32),
        grid_spec=pltpu.PrefetchScalarGridSpec(
            num_scalar_prefetch=0,
            grid=(n_tiles,),
            in_specs=[slab_spec] + [const_spec(a) for a in param_args],
            out_specs=pl.BlockSpec((1, batch_tile), lambda i: (0, i)),
        ),
        compiler_params=pltpu.CompilerParams(
            dimension_semantics=("parallel",)),
    )(x_slab, *param_args)

    return out[:, :B].T                      # (B, 1)


# --------------- JAX glue (embeddings / pooling / concat) ---------------

def sum_pooling(emb_seq):
    # SumPooling(1): sum over the sequence dimension.
    return jnp.sum(emb_seq, axis=1)


def build_inputs_and_params(key, batch=300, emb=8, hidden=(32, 16)):
    keys = jax.random.split(key, 16)

    # --- raw features ---
    n1 = jax.random.normal(keys[0], (batch,), jnp.float32)
    n2 = jax.random.normal(keys[1], (batch,), jnp.float32)
    c1 = jax.random.randint(keys[2], (batch,), 0, 10, jnp.int32)
    c2 = jax.random.randint(keys[3], (batch,), 0, 12, jnp.int32)
    s1 = jax.random.randint(keys[4], (batch, 5), 0, 20, jnp.int32)

    # --- embedding tables ---
    emb_c1 = 0.1 * jax.random.normal(keys[5], (10, emb), jnp.float32)
    emb_c2 = 0.1 * jax.random.normal(keys[6], (12, emb), jnp.float32)
    emb_s1 = 0.1 * jax.random.normal(keys[7], (20, emb), jnp.float32)

    # --- feature assembly (glue, stays in JAX) ---
    c1_e = jnp.take(emb_c1, c1, axis=0)                 # (B, E)
    c2_e = jnp.take(emb_c2, c2, axis=0)                 # (B, E)
    s1_e = sum_pooling(jnp.take(emb_s1, s1, axis=0))    # (B, E)

    wide_inputs = [n1.reshape(-1, 1), c1_e]                      # wide: n1, c1
    deep_inputs = [n1.reshape(-1, 1), n2.reshape(-1, 1),
                   c1_e, c2_e, s1_e]                             # deep: n1,n2,c1,c2,s1
    cross_inputs = [c1_e * c2_e]                                 # cross: (c1, c2)

    wide_cross = jnp.concatenate(wide_inputs + cross_inputs, axis=1)  # (B, 17)
    deep_cat = jnp.concatenate(deep_inputs, axis=1)                   # (B, 26)

    Wd = wide_cross.shape[1]
    Dd = deep_cat.shape[1]
    H1, H2 = hidden
    out_size = 1  # num_classes=2, final_activation='sigmoid'

    def lin_init(k, fan_in, fan_out):
        bound = 1.0 / jnp.sqrt(jnp.float32(fan_in))
        return jax.random.uniform(k, (fan_in, fan_out), jnp.float32, -bound, bound)

    params = {
        "w1": lin_init(keys[8], Dd, H1),
        "b1": 0.01 * jax.random.normal(keys[9], (1, H1), jnp.float32),
        "g1": 1.0 + 0.01 * jax.random.normal(keys[10], (1, H1), jnp.float32),
        "be1": jnp.zeros((1, H1), jnp.float32),
        "m1": jnp.zeros((1, H1), jnp.float32),
        "v1": jnp.ones((1, H1), jnp.float32),
        "w2": lin_init(keys[11], H1, H2),
        "b2": 0.01 * jax.random.normal(keys[12], (1, H2), jnp.float32),
        "g2": 1.0 + 0.01 * jax.random.normal(keys[13], (1, H2), jnp.float32),
        "be2": jnp.zeros((1, H2), jnp.float32),
        "m2": jnp.zeros((1, H2), jnp.float32),
        "v2": jnp.ones((1, H2), jnp.float32),
        "wf_wide": lin_init(keys[14], Wd, out_size),
        "wf_deep": lin_init(keys[15], H2, out_size),
        "bf": jnp.zeros((1, out_size), jnp.float32),
    }
    return wide_cross, deep_cat, params


def reference_forward(wide_cross, deep_cat, p):
    eps = 1e-5
    hp = jax.lax.Precision.HIGHEST
    h1 = jnp.dot(deep_cat, p["w1"], precision=hp) + p["b1"]
    h1 = (h1 - p["m1"]) / jnp.sqrt(p["v1"] + eps) * p["g1"] + p["be1"]
    h1 = jnp.maximum(h1, 0.0)
    h2 = jnp.dot(h1, p["w2"], precision=hp) + p["b2"]
    h2 = (h2 - p["m2"]) / jnp.sqrt(p["v2"] + eps) * p["g2"] + p["be2"]
    h2 = jnp.maximum(h2, 0.0)
    logit = (jnp.dot(wide_cross, p["wf_wide"], precision=hp)
             + jnp.dot(h2, p["wf_deep"], precision=hp) + p["bf"])
    return jax.nn.sigmoid(logit)


if __name__ == "__main__":
    key = jax.random.PRNGKey(0)
    B = 300  # deliberately not a multiple of the tile to exercise padding
    wide_cross, deep_cat, params = build_inputs_and_params(key, batch=B, emb=8,
                                                           hidden=(32, 16))

    out = widedeep_pallas(wide_cross, deep_cat, params, batch_tile=128)
    out = jax.block_until_ready(out)

    # Reference consumes the same bf16-rounded slabs the kernel sees; tolerance
    # covers the approx EUP reciprocal in the sigmoid epilogue.
    wide_q = wide_cross.astype(jnp.bfloat16).astype(jnp.float32)
    deep_q = deep_cat.astype(jnp.bfloat16).astype(jnp.float32)
    ref = jax.block_until_ready(reference_forward(wide_q, deep_q, params))

    assert out.shape == (B, 1), out.shape
    max_err = float(jnp.max(jnp.abs(out - ref)))
    assert jnp.allclose(out, ref, atol=2e-3, rtol=2e-3), max_err

    print("KERNEL_OK")
</pallas_src>

<mosaic_0001>
module attributes {stable_mosaic.version = 11 : i64} {
  func.func @_widedeep_kernel(%arg0: i32, %arg1: memref<56x128xbf16, #tpu.memory_space<vmem>>, %arg2: memref<32x32xf32, #tpu.memory_space<vmem>>, %arg3: memref<32x1xf32, #tpu.memory_space<vmem>>, %arg4: memref<16x32xf32, #tpu.memory_space<vmem>>, %arg5: memref<16x1xf32, #tpu.memory_space<vmem>>, %arg6: memref<24x1xf32, #tpu.memory_space<vmem>>, %arg7: memref<16x1xf32, #tpu.memory_space<vmem>>, %arg8: memref<1x1xf32, #tpu.memory_space<vmem>>, %arg9: memref<1x128xf32, #tpu.memory_space<vmem>>) attributes {dimension_semantics = [#tpu.dimension_semantics<parallel>], iteration_bounds = array<i64: 3>, scalar_prefetch = 0 : i64, scratch_operands = 0 : i64, tpu.core_type = #tpu.core_type<tc>, window_params = [{transform_indices = @transform_0, window_bounds = array<i64: 56, 128>}, {pipeline_mode = #tpu.pipeline_mode<synchronous>, transform_indices = @transform_1, window_bounds = array<i64: 32, 32>}, {pipeline_mode = #tpu.pipeline_mode<synchronous>, transform_indices = @transform_2, window_bounds = array<i64: 32, 1>}, {pipeline_mode = #tpu.pipeline_mode<synchronous>, transform_indices = @transform_3, window_bounds = array<i64: 16, 32>}, {pipeline_mode = #tpu.pipeline_mode<synchronous>, transform_indices = @transform_4, window_bounds = array<i64: 16, 1>}, {pipeline_mode = #tpu.pipeline_mode<synchronous>, transform_indices = @transform_5, window_bounds = array<i64: 24, 1>}, {pipeline_mode = #tpu.pipeline_mode<synchronous>, transform_indices = @transform_6, window_bounds = array<i64: 16, 1>}, {pipeline_mode = #tpu.pipeline_mode<synchronous>, transform_indices = @transform_7, window_bounds = array<i64: 1, 1>}, {transform_indices = @transform_8, window_bounds = array<i64: 1, 128>}]} {
    %c0 = arith.constant 0 : index
    %c0_0 = arith.constant 0 : index
    %0 = vector.load %arg1[%c0, %c0_0] : memref<56x128xbf16, #tpu.memory_space<vmem>>, vector<24x128xbf16>
    %1 = arith.extf %0 : vector<24x128xbf16> to vector<24x128xf32>
    %c24 = arith.constant 24 : index
    %c0_1 = arith.constant 0 : index
    %2 = vector.load %arg1[%c24, %c0_1] : memref<56x128xbf16, #tpu.memory_space<vmem>>, vector<32x128xbf16>
    %3 = arith.extf %2 : vector<32x128xbf16> to vector<32x128xf32>
    %c0_2 = arith.constant 0 : index
    %c0_3 = arith.constant 0 : index
    %4 = vector.load %arg2[%c0_2, %c0_3] : memref<32x32xf32, #tpu.memory_space<vmem>>, vector<32x32xf32>
    %cst = arith.constant dense<0.000000e+00> : vector<32x128xf32>
    %5 = tpu.matmul %4, %3, %cst {dimension_numbers = #tpu.dot_dimension_numbers<[1], [0], [0], [1], [0, 0, 1, 1], [], []>} : vector<32x32xf32>, vector<32x128xf32>, vector<32x128xf32> -> vector<32x128xf32>
    %c0_4 = arith.constant 0 : index
    %c0_5 = arith.constant 0 : index
    %6 = vector.load %arg3[%c0_4, %c0_5] : memref<32x1xf32, #tpu.memory_space<vmem>>, vector<32x1xf32>
    %7 = vector.broadcast %6 : vector<32x1xf32> to vector<32x128xf32>
    %8 = arith.addf %5, %7 : vector<32x128xf32>
    %cst_6 = arith.constant 0.000000e+00 : f32
    %9 = vector.broadcast %cst_6 : f32 to vector<32x128xf32>
    %10 = arith.maximumf %8, %9 : vector<32x128xf32>
    %c0_7 = arith.constant 0 : index
    %c0_8 = arith.constant 0 : index
    %11 = vector.load %arg4[%c0_7, %c0_8] : memref<16x32xf32, #tpu.memory_space<vmem>>, vector<16x32xf32>
    %cst_9 = arith.constant dense<0.000000e+00> : vector<16x128xf32>
    %12 = tpu.matmul %11, %10, %cst_9 {dimension_numbers = #tpu.dot_dimension_numbers<[1], [0], [0], [1], [0, 0, 1, 1], [], []>} : vector<16x32xf32>, vector<32x128xf32>, vector<16x128xf32> -> vector<16x128xf32>
    %c0_10 = arith.constant 0 : index
    %c0_11 = arith.constant 0 : index
    %13 = vector.load %arg5[%c0_10, %c0_11] : memref<16x1xf32, #tpu.memory_space<vmem>>, vector<16x1xf32>
    %14 = vector.broadcast %13 : vector<16x1xf32> to vector<16x128xf32>
    %15 = arith.addf %12, %14 : vector<16x128xf32>
    %cst_12 = arith.constant 0.000000e+00 : f32
    %16 = vector.broadcast %cst_12 : f32 to vector<16x128xf32>
    %17 = arith.maximumf %15, %16 : vector<16x128xf32>
    %c0_13 = arith.constant 0 : index
    %c0_14 = arith.constant 0 : index
    %18 = vector.load %arg6[%c0_13, %c0_14] : memref<24x1xf32, #tpu.memory_space<vmem>>, vector<24x1xf32>
    %19 = vector.broadcast %18 : vector<24x1xf32> to vector<24x128xf32>
    %20 = arith.mulf %1, %19 : vector<24x128xf32>
    %cst_15 = arith.constant dense<0.000000e+00> : vector<128xf32>
    %21 = vector.multi_reduction <add>, %20, %cst_15 [0] : vector<24x128xf32> to vector<128xf32>
    %22 = vector.shape_cast %21 : vector<128xf32> to vector<1x128xf32>
    %c0_16 = arith.constant 0 : index
    %c0_17 = arith.constant 0 : index
    %23 = vector.load %arg7[%c0_16, %c0_17] : memref<16x1xf32, #tpu.memory_space<vmem>>, vector<16x1xf32>
    %24 = vector.broadcast %23 : vector<16x1xf32> to vector<16x128xf32>
    %25 = arith.mulf %17, %24 : vector<16x128xf32>
    %cst_18 = arith.constant dense<0.000000e+00> : vector<128xf32>
    %26 = vector.multi_reduction <add>, %25, %cst_18 [0] : vector<16x128xf32> to vector<128xf32>
    %27 = vector.shape_cast %26 : vector<128xf32> to vector<1x128xf32>
    %28 = arith.addf %22, %27 : vector<1x128xf32>
    %c0_19 = arith.constant 0 : index
    %c0_20 = arith.constant 0 : index
    %29 = vector.load %arg8[%c0_19, %c0_20] : memref<1x1xf32, #tpu.memory_space<vmem>>, vector<1x1xf32>
    %30 = vector.broadcast %29 : vector<1x1xf32> to vector<1x128xf32>
    %31 = arith.addf %28, %30 : vector<1x128xf32>
    %cst_21 = arith.constant 0.000000e+00 : f32
    %32 = vector.broadcast %cst_21 : f32 to vector<1x128xf32>
    %33 = arith.subf %32, %31 : vector<1x128xf32>
    %34 = math.exp %33 : vector<1x128xf32>
    %cst_22 = arith.constant 1.000000e+00 : f32
    %35 = vector.broadcast %cst_22 : f32 to vector<1x128xf32>
    %36 = arith.addf %35, %34 : vector<1x128xf32>
    %37 = tpu.reciprocal %36 {approx = true} : vector<1x128xf32> -> vector<1x128xf32>
    %c0_23 = arith.constant 0 : index
    %c0_24 = arith.constant 0 : index
    %38 = vector.load %arg9[%c0_23, %c0_24] : memref<1x128xf32, #tpu.memory_space<vmem>>, vector<1x128xf32>
    tpu.vector_store %arg9[%c0_23, %c0_24], %37 {strides = array<i32>} : memref<1x128xf32, #tpu.memory_space<vmem>>, vector<1x128xf32>,
    return
  }
  func.func @transform_0(%arg0: i32) -> (i32, i32) {
    %c0_i32 = arith.constant 0 : i32
    %c0_i32_0 = arith.constant 0 : i32
    return %c0_i32, %arg0 : i32, i32
  }
  func.func @transform_1(%arg0: i32) -> (i32, i32) {
    %c0_i32 = arith.constant 0 : i32
    %c0_i32_0 = arith.constant 0 : i32
    %c0_i32_1 = arith.constant 0 : i32
    return %c0_i32, %c0_i32_0 : i32, i32
  }
  func.func @transform_2(%arg0: i32) -> (i32, i32) {
    %c0_i32 = arith.constant 0 : i32
    %c0_i32_0 = arith.constant 0 : i32
    %c0_i32_1 = arith.constant 0 : i32
    return %c0_i32, %c0_i32_0 : i32, i32
  }
  func.func @transform_3(%arg0: i32) -> (i32, i32) {
    %c0_i32 = arith.constant 0 : i32
    %c0_i32_0 = arith.constant 0 : i32
    %c0_i32_1 = arith.constant 0 : i32
    return %c0_i32, %c0_i32_0 : i32, i32
  }
  func.func @transform_4(%arg0: i32) -> (i32, i32) {
    %c0_i32 = arith.constant 0 : i32
    %c0_i32_0 = arith.constant 0 : i32
    %c0_i32_1 = arith.constant 0 : i32
    return %c0_i32, %c0_i32_0 : i32, i32
  }
  func.func @transform_5(%arg0: i32) -> (i32, i32) {
    %c0_i32 = arith.constant 0 : i32
    %c0_i32_0 = arith.constant 0 : i32
    %c0_i32_1 = arith.constant 0 : i32
    return %c0_i32, %c0_i32_0 : i32, i32
  }
  func.func @transform_6(%arg0: i32) -> (i32, i32) {
    %c0_i32 = arith.constant 0 : i32
    %c0_i32_0 = arith.constant 0 : i32
    %c0_i32_1 = arith.constant 0 : i32
    return %c0_i32, %c0_i32_0 : i32, i32
  }
  func.func @transform_7(%arg0: i32) -> (i32, i32) {
    %c0_i32 = arith.constant 0 : i32
    %c0_i32_0 = arith.constant 0 : i32
    %c0_i32_1 = arith.constant 0 : i32
    return %c0_i32, %c0_i32_0 : i32, i32
  }
  func.func @transform_8(%arg0: i32) -> (i32, i32) {
    %c0_i32 = arith.constant 0 : i32
    %c0_i32_0 = arith.constant 0 : i32
    return %c0_i32, %arg0 : i32, i32
  }
}

</mosaic_0001>

<llo_original>
// kernel: tpu_custom_call.1
$region0: #{tpu_custom_call.1}
  #allocation0 [shape = 'u32[]', space=smem, size = 0x4, offset = 0x4, fixed_abs, tag = 'smem constant byte address 0x4 - core index']
  #allocation1 [shape = 'u32[144,128]{1,0:T(1,128)}', space=vmem, size = 0x12000, scoped, tag = 'internal scratch']
  #allocation2 [shape = 'f32[1,1]{1,0:T(1,128)S(1)}', space=vmem, size = 0x200, scoped, tag = 'scoped memory for tpu_custom_call.1']
  %s0 = inlined_call_operand.vmem [shape: bf16[56,384], index: 0, kind: input, shape index: {}]
  %s1 = inlined_call_operand.hbm [shape: f32[32,32], index: 1, kind: input, shape index: {}]
  %s2 = inlined_call_operand.vmem [shape: f32[32,1], index: 2, kind: input, shape index: {}]
  %s3 = inlined_call_operand.hbm [shape: f32[16,32], index: 3, kind: input, shape index: {}]
  %s4 = inlined_call_operand.vmem [shape: f32[16,1], index: 4, kind: input, shape index: {}]
  %s5 = inlined_call_operand.vmem [shape: f32[24,1], index: 5, kind: input, shape index: {}]
  %s6 = inlined_call_operand.vmem [shape: f32[16,1], index: 6, kind: input, shape index: {}]
  %s7 = inlined_call_operand.<no memory space> [shape: f32[1,1], index: 7, kind: input, shape index: {}]
  %s8 = inlined_call_operand.hbm [shape: f32[1,384], index: 8, kind: output, shape index: {}]
  %s9 = sld [smem:[#allocation0]]
  $region114: #{tpu_custom_call.1} parent=0
    _
  %s11 = ssub.s32 1, %s9
  %s12 = scalar_select 0, %s11, %s9
  %v13 = vstv %s7
  %14 = vst [vmem:[#allocation2] sm:$0x1] %v13
  $region1: #{tpu_custom_call.1} parent=0
    #allocation3 [shape = 'u8[28672]{0}', space=vmem, size = 0x7000, scoped, tag = 'input window, operand 0']
    #allocation4 [shape = 'u8[16384]{0}', space=vmem, size = 0x4000, scoped, tag = 'input window, operand 1, single buffered']
    #allocation5 [shape = 's32[2]{0}', space=sflag, size = 0x8, scoped, tag = 'scoped memory for tpu_custom_call.1']
    #allocation6 [shape = 's32[2]{0}', space=sflag, size = 0x8, scoped, tag = 'scoped memory for tpu_custom_call.1']
    #allocation7 [shape = 'u8[8192]{0}', space=vmem, size = 0x2000, scoped, tag = 'input window, operand 3, single buffered']
    #allocation8 [shape = 's32[1]{0}', space=sflag, size = 0x4, scoped, tag = 'scoped memory for tpu_custom_call.1']
    #allocation9 [shape = 'u8[1024]{0}', space=vmem, size = 0x400, scoped, tag = 'output window, operand 0']
    %15 = vsyncpa [#allocation5], 0
    %16 = vsyncpa [#allocation8], 0
    %17 = vsyncpa [#allocation6], 0
    %s18 = scalar_lea.sflag [#allocation6], 1
    %19 = vsyncpa %s18, 0
    loop: start=0, step=1, limit=5
    $region2: #{tpu_custom_call.1} parent=1 // loop_pre_header
      _
    $region3: #{tpu_custom_call.1} parent=1 // loop_header
      %s21 = sphi 0, %s25
      %p22 = scmp.ge.s32.totalorder %s21, 5
      %s31 = sphi 0, %s33
      %s34 = sphi 0, %s31
      %s35 = sphi 0, %s34
      %s51 = sphi 0, %s35
      %s55 = sphi 0, %s55
      %s57 = sphi 0, %s55
      %s58 = sphi 0, %s57
      %s72 = sphi 0, %s58
      %s76 = sphi 0, %s76
      %s78 = sphi 0, %s76
      %s79 = sphi 0, %s78
      %s93 = sphi 0, %s79
      %s97 = sphi 0, %s97
      %s99 = sphi 0, %s97
      %s100 = sphi 0, %s99
      %s114 = sphi 0, %s100
      %s118 = sphi 0, %s118
      %s120 = sphi 0, %s118
      %s121 = sphi 0, %s120
      %s135 = sphi 0, %s121
      %s139 = sphi 0, %s139
      %s141 = sphi 0, %s139
      %s142 = sphi 0, %s141
      %s156 = sphi 0, %s142
      %s160 = sphi 0, %s160
      %s162 = sphi 0, %s160
      %s163 = sphi 0, %s162
      %s177 = sphi 0, %s163
      %s181 = sphi 0, %s181
      %s183 = sphi 0, %s181
      %s184 = sphi 0, %s183
      %s198 = sphi 0, %s184
      %s204 = sphi 0, %s206
      %s207 = sphi 0, %s204
      %s208 = sphi 0, %s207
      %s224 = sphi 0, %s208
    $region4: #{tpu_custom_call.1} parent=1 // loop_header_branch
      %24 = sbr.rel (%p22) target = $region8
    $region5: #{tpu_custom_call.1} parent=1 // loop_body
      %s26 = ssub.s32 %s21, 1
      %s27 = ssub.s32 %s21, 2
      %s28 = sadd.s32 %s21, 1
      %s29 = ssub.s32 %s21, %s28
      %p30 = scmp.eq.s32.totalorder %s29, 0
      %s32 = sadd.s32 %s31, 1
      %s33 = scalar_select %p30, %s31, %s32
      %p36 = pneg %p30
      %p37 = scmp.eq.s32.totalorder %s21, 2
      %p38 = por %p36, %p37
      %p39 = scmp.ne.s32.totalorder %s31, %s34
      %p40 = scmp.eq.s32.totalorder %s21, 0
      %p41 = por %p39, %p40
      %p42 = scmp.ne.s32.totalorder %s31, %s34
      %p43 = scmp.eq.s32.totalorder %s26, 2
      %p44 = por %p42, %p43
      %p45 = scmp.ne.s32.totalorder %s34, %s35
      %p46 = scmp.eq.s32.totalorder %s26, 0
      %p47 = por %p45, %p46
      %p48 = scmp.ne.s32.totalorder %s34, %s35
      %p49 = scmp.eq.s32.totalorder %s27, 2
      %p50 = por %p48, %p49
      %p52 = scmp.ne.s32.totalorder %s35, %s51
      %p53 = scmp.eq.s32.totalorder %s27, 0
      %p54 = por %p52, %p53
      %s56 = sadd.s32 %s55, 1
      %p59 = scmp.eq.s32.totalorder %s21, 2
      %p60 = scmp.ne.s32.totalorder %s55, %s57
      %p61 = scmp.eq.s32.totalorder %s21, 0
      %p62 = por %p60, %p61
      %p63 = scmp.ne.s32.totalorder %s55, %s57
      %p64 = scmp.eq.s32.totalorder %s26, 2
      %p65 = por %p63, %p64
      %p66 = scmp.ne.s32.totalorder %s57, %s58
      %p67 = scmp.eq.s32.totalorder %s26, 0
      %p68 = por %p66, %p67
      %p69 = scmp.ne.s32.totalorder %s57, %s58
      %p70 = scmp.eq.s32.totalorder %s27, 2
      %p71 = por %p69, %p70
      %p73 = scmp.ne.s32.totalorder %s58, %s72
      %p74 = scmp.eq.s32.totalorder %s27, 0
      %p75 = por %p73, %p74
      %s77 = sadd.s32 %s76, 1
      %p80 = scmp.eq.s32.totalorder %s21, 2
      %p81 = scmp.ne.s32.totalorder %s76, %s78
      %p82 = scmp.eq.s32.totalorder %s21, 0
      %p83 = por %p81, %p82
      %p84 = scmp.ne.s32.totalorder %s76, %s78
      %p85 = scmp.eq.s32.totalorder %s26, 2
      %p86 = por %p84, %p85
      %p87 = scmp.ne.s32.totalorder %s78, %s79
      %p88 = scmp.eq.s32.totalorder %s26, 0
      %p89 = por %p87, %p88
      %p90 = scmp.ne.s32.totalorder %s78, %s79
      %p91 = scmp.eq.s32.totalorder %s27, 2
      %p92 = por %p90, %p91
      %p94 = scmp.ne.s32.totalorder %s79, %s93
      %p95 = scmp.eq.s32.totalorder %s27, 0
      %p96 = por %p94, %p95
      %s98 = sadd.s32 %s97, 1
      %p101 = scmp.eq.s32.totalorder %s21, 2
      %p102 = scmp.ne.s32.totalorder %s97, %s99
      %p103 = scmp.eq.s32.totalorder %s21, 0
      %p104 = por %p102, %p103
      %p105 = scmp.ne.s32.totalorder %s97, %s99
      %p106 = scmp.eq.s32.totalorder %s26, 2
      %p107 = por %p105, %p106
      %p108 = scmp.ne.s32.totalorder %s99, %s100
      %p109 = scmp.eq.s32.totalorder %s26, 0
      %p110 = por %p108, %p109
      %p111 = scmp.ne.s32.totalorder %s99, %s100
      %p112 = scmp.eq.s32.totalorder %s27, 2
      %p113 = por %p111, %p112
      %p115 = scmp.ne.s32.totalorder %s100, %s114
      %p116 = scmp.eq.s32.totalorder %s27, 0
      %p117 = por %p115, %p116
      %s119 = sadd.s32 %s118, 1
      %p122 = scmp.eq.s32.totalorder %s21, 2
      %p123 = scmp.ne.s32.totalorder %s118, %s120
      %p124 = scmp.eq.s32.totalorder %s21, 0
      %p125 = por %p123, %p124
      %p126 = scmp.ne.s32.totalorder %s118, %s120
      %p127 = scmp.eq.s32.totalorder %s26, 2
      %p128 = por %p126, %p127
      %p129 = scmp.ne.s32.totalorder %s120, %s121
      %p130 = scmp.eq.s32.totalorder %s26, 0
      %p131 = por %p129, %p130
      %p132 = scmp.ne.s32.totalorder %s120, %s121
      %p133 = scmp.eq.s32.totalorder %s27, 2
      %p134 = por %p132, %p133
      %p136 = scmp.ne.s32.totalorder %s121, %s135
      %p137 = scmp.eq.s32.totalorder %s27, 0
      %p138 = por %p136, %p137
      %s140 = sadd.s32 %s139, 1
      %p143 = scmp.eq.s32.totalorder %s21, 2
      %p144 = scmp.ne.s32.totalorder %s139, %s141
      %p145 = scmp.eq.s32.totalorder %s21, 0
      %p146 = por %p144, %p145
      %p147 = scmp.ne.s32.totalorder %s139, %s141
      %p148 = scmp.eq.s32.totalorder %s26, 2
      %p149 = por %p147, %p148
      %p150 = scmp.ne.s32.totalorder %s141, %s142
      %p151 = scmp.eq.s32.totalorder %s26, 0
      %p152 = por %p150, %p151
      %p153 = scmp.ne.s32.totalorder %s141, %s142
      %p154 = scmp.eq.s32.totalorder %s27, 2
      %p155 = por %p153, %p154
      %p157 = scmp.ne.s32.totalorder %s142, %s156
      %p158 = scmp.eq.s32.totalorder %s27, 0
      %p159 = por %p157, %p158
      %s161 = sadd.s32 %s160, 1
      %p164 = scmp.eq.s32.totalorder %s21, 2
      %p165 = scmp.ne.s32.totalorder %s160, %s162
      %p166 = scmp.eq.s32.totalorder %s21, 0
      %p167 = por %p165, %p166
      %p168 = scmp.ne.s32.totalorder %s160, %s162
      %p169 = scmp.eq.s32.totalorder %s26, 2
      %p170 = por %p168, %p169
      %p171 = scmp.ne.s32.totalorder %s162, %s163
      %p172 = scmp.eq.s32.totalorder %s26, 0
      %p173 = por %p171, %p172
      %p174 = scmp.ne.s32.totalorder %s162, %s163
      %p175 = scmp.eq.s32.totalorder %s27, 2
      %p176 = por %p174, %p175
      %p178 = scmp.ne.s32.totalorder %s163, %s177
      %p179 = scmp.eq.s32.totalorder %s27, 0
      %p180 = por %p178, %p179
      %s182 = sadd.s32 %s181, 1
      %p185 = scmp.eq.s32.totalorder %s21, 2
      %p186 = scmp.ne.s32.totalorder %s181, %s183
      %p187 = scmp.eq.s32.totalorder %s21, 0
      %p188 = por %p186, %p187
      %p189 = scmp.ne.s32.totalorder %s181, %s183
      %p190 = scmp.eq.s32.totalorder %s26, 2
      %p191 = por %p189, %p190
      %p192 = scmp.ne.s32.totalorder %s183, %s184
      %p193 = scmp.eq.s32.totalorder %s26, 0
      %p194 = por %p192, %p193
      %p195 = scmp.ne.s32.totalorder %s183, %s184
      %p196 = scmp.eq.s32.totalorder %s27, 2
      %p197 = por %p195, %p196
      %p199 = scmp.ne.s32.totalorder %s184, %s198
      %p200 = scmp.eq.s32.totalorder %s27, 0
      %p201 = por %p199, %p200
      %s202 = ssub.s32 %s21, %s28
      %p203 = scmp.eq.s32.totalorder %s202, 0
      %s205 = sadd.s32 %s204, 1
      %s206 = scalar_select %p203, %s204, %s205
      %p209 = pneg %p203
      %p210 = scmp.eq.s32.totalorder %s21, 2
      %p211 = por %p209, %p210
      %p212 = scmp.ne.s32.totalorder %s204, %s207
      %p213 = scmp.eq.s32.totalorder %s21, 0
      %p214 = por %p212, %p213
      %p215 = scmp.ne.s32.totalorder %s204, %s207
      %p216 = scmp.eq.s32.totalorder %s26, 2
      %p217 = por %p215, %p216
      %p218 = scmp.ne.s32.totalorder %s207, %s208
      %p219 = scmp.eq.s32.totalorder %s26, 0
      %p220 = por %p218, %p219
      %p221 = scmp.ne.s32.totalorder %s207, %s208
      %p222 = scmp.eq.s32.totalorder %s27, 2
      %p223 = por %p221, %p222
      %p225 = scmp.ne.s32.totalorder %s208, %s224
      %p226 = scmp.eq.s32.totalorder %s27, 0
      %p227 = por %p225, %p226
      %p228 = scmp.le.s32.totalorder 1, %s21
      %p229 = scmp.lt.s32.totalorder %s21, 4
      %p230 = pnand %p228, %p229
      %p231 = pneg %p230
      // Predicated region
      $region9: #{tpu_custom_call.1} parent=5 // pred_check
        _
      $region10: #{tpu_custom_call.1} parent=5 // pred_check_branch
        %233 = sbr.rel (%p230) target = $region12
      $region11: #{tpu_custom_call.1} parent=5 // pred_region
        %s234 = ssub.s32 %s21, 1
        // Predicated region
        $region13: #{tpu_custom_call.1} parent=11 // pred_check
          %p235 = pneg %p68
        $region14: #{tpu_custom_call.1} parent=11 // pred_check_branch
          %237 = sbr.rel (%p235) target = $region16
        $region15: #{tpu_custom_call.1} parent=11 // pred_region
          %s239 = ssub.s32 512, 512
          %240 = vsyncadd [#allocation5], %s239
          %s241 = sshll.u32 [#allocation4], 4
          %s242 = int_to_ptr.vmem [resolvable:$true] %s241
          %247 = dma.hbm_to_vmem [thread:$0]  %s1, 512, %s242, [#allocation5], 128, 128, 8
        $region16: #{tpu_custom_call.1} parent=11 // pred_fallthru
          _
        // Predicated region
        $region17: #{tpu_custom_call.1} parent=11 // pred_check
          %p248 = pneg %p89
        $region18: #{tpu_custom_call.1} parent=11 // pred_check_branch
          %250 = sbr.rel (%p248) target = $region20
        $region19: #{tpu_custom_call.1} parent=11 // pred_region
          _
        $region20: #{tpu_custom_call.1} parent=11 // pred_fallthru
          _
        // Predicated region
        $region21: #{tpu_custom_call.1} parent=11 // pred_check
          %p251 = pneg %p110
        $region22: #{tpu_custom_call.1} parent=11 // pred_check_branch
          %253 = sbr.rel (%p251) target = $region24
        $region23: #{tpu_custom_call.1} parent=11 // pred_region
          %s255 = ssub.s32 256, 256
          %256 = vsyncadd [#allocation8], %s255
          %s257 = sshll.u32 [#allocation7], 4
          %s258 = int_to_ptr.vmem [resolvable:$true] %s257
          %263 = dma.hbm_to_vmem [thread:$0]  %s3, 256, %s258, [#allocation8], 128, 128, 8
        $region24: #{tpu_custom_call.1} parent=11 // pred_fallthru
          _
        // Predicated region
        $region25: #{tpu_custom_call.1} parent=11 // pred_check
          %p264 = pneg %p131
        $region26: #{tpu_custom_call.1} parent=11 // pred_check_branch
          %266 = sbr.rel (%p264) target = $region28
        $region27: #{tpu_custom_call.1} parent=11 // pred_region
          _
        $region28: #{tpu_custom_call.1} parent=11 // pred_fallthru
          _
        // Predicated region
        $region29: #{tpu_custom_call.1} parent=11 // pred_check
          %p267 = pneg %p152
        $region30: #{tpu_custom_call.1} parent=11 // pred_check_branch
          %269 = sbr.rel (%p267) target = $region32
        $region31: #{tpu_custom_call.1} parent=11 // pred_region
          _
        $region32: #{tpu_custom_call.1} parent=11 // pred_fallthru
          _
        // Predicated region
        $region33: #{tpu_custom_call.1} parent=11 // pred_check
          %p270 = pneg %p173
        $region34: #{tpu_custom_call.1} parent=11 // pred_check_branch
          %272 = sbr.rel (%p270) target = $region36
        $region35: #{tpu_custom_call.1} parent=11 // pred_region
          _
        $region36: #{tpu_custom_call.1} parent=11 // pred_fallthru
          _
        // Predicated region
        $region37: #{tpu_custom_call.1} parent=11 // pred_check
          %p273 = pneg %p194
        $region38: #{tpu_custom_call.1} parent=11 // pred_check_branch
          %275 = sbr.rel (%p273) target = $region40
        $region39: #{tpu_custom_call.1} parent=11 // pred_region
          _
        $region40: #{tpu_custom_call.1} parent=11 // pred_fallthru
          _
      $region12: #{tpu_custom_call.1} parent=5 // pred_fallthru
        _
      %p276 = scmp.lt.s32.totalorder %s21, 3
      // Predicated region
      $region41: #{tpu_custom_call.1} parent=5 // pred_check
        %p277 = pneg %p276
      $region42: #{tpu_custom_call.1} parent=5 // pred_check_branch
        %279 = sbr.rel (%p277) target = $region44
      $region43: #{tpu_custom_call.1} parent=5 // pred_region
        // Predicated region
        $region45: #{tpu_custom_call.1} parent=43 // pred_check
          %p280 = pneg %p41
        $region46: #{tpu_custom_call.1} parent=43 // pred_check_branch
          %282 = sbr.rel (%p280) target = $region48
        $region47: #{tpu_custom_call.1} parent=43 // pred_region
          %s283 = sand.u32 %s31, 1
          %s284 = sand.u32 %s31, 1
          %s285 = smul.addr %s284, 28
          %s286 = scalar_lea.vmem [#allocation3], %s285
          %s287 = smul.addr %s21, 4
          %s288 = scalar_lea.vmem %s0, %s287
          // Predicated region
          $region49: #{tpu_custom_call.1} parent=47 // pred_check
            _
          $region50: #{tpu_custom_call.1} parent=47 // pred_check_branch
            %290 = sbr.rel (0) target = $region52
          $region51: #{tpu_custom_call.1} parent=47 // pred_region
            // Predicated region
            $region53: #{tpu_custom_call.1} parent=51 // pred_check
              _
            $region54: #{tpu_custom_call.1} parent=51 // pred_check_branch
              %292 = sbr.rel target = $region56
            $region55: #{tpu_custom_call.1} parent=51 // pred_region
              // Predicated region
              $region68: #{tpu_custom_call.1} parent=55 // pred_check
                _
              $region69: #{tpu_custom_call.1} parent=55 // pred_check_branch
                %320 = sbr.rel (0) target = $region71
              $region70: #{tpu_custom_call.1} parent=55 // pred_region
                loop: start=0, step=1, limit=1
                $region72: #{tpu_custom_call.1} parent=70 // loop_pre_header
                  _
                $region73: #{tpu_custom_call.1} parent=70 // loop_header
                  %s322 = sphi 0, %s326
                  %p323 = scmp.ge.s32.totalorder %s322, 1
                  %s327 = sphi %s288, %s288
                  %s328 = sphi %s286, %s286
                $region74: #{tpu_custom_call.1} parent=70 // loop_header_branch
                  %325 = sbr.rel (%p323) target = $region78
                $region75: #{tpu_custom_call.1} parent=70 // loop_body
                  _
                $region76: #{tpu_custom_call.1} parent=70 // loop_footer
                  %s326 = sadd.s32 1, %s322
                $region77: #{tpu_custom_call.1} parent=70 // loop_footer_branch
                  %321 = sbr.rel target = $region73
                $region78: #{tpu_custom_call.1} parent=70 // loop_exit
                  _
                %s330 = ssub.s32 16, 1
                loop: start=0, step=1, limit=1
                $region79: #{tpu_custom_call.1} parent=70 // loop_pre_header
                  _
                $region80: #{tpu_custom_call.1} parent=70 // loop_header
                  %s332 = sphi 0, %s336
                  %p333 = scmp.ge.s32.totalorder %s332, 1
                  %s337 = sphi %s288, %s288
                  %s338 = sphi %s286, %s286
                $region81: #{tpu_custom_call.1} parent=70 // loop_header_branch
                  %335 = sbr.rel (%p333) target = $region85
                $region82: #{tpu_custom_call.1} parent=70 // loop_body
                  %v339 = vld [vmem:[%s337] sm:%s330]
                  %340 = vst [vmem:[%s338] sm:%s330] %v339
                  %v341 = vld [vmem:[%s337 + $0xc] sm:%s330]
                  %342 = vst [vmem:[%s338 + $0x4] sm:%s330] %v341
                  %v343 = vld [vmem:[%s337 + $0x18] sm:%s330]
                  %344 = vst [vmem:[%s338 + $0x8] sm:%s330] %v343
                  %v345 = vld [vmem:[%s337 + $0x24] sm:%s330]
                  %346 = vst [vmem:[%s338 + $0xc] sm:%s330] %v345
                  %v347 = vld [vmem:[%s337 + $0x30] sm:%s330]
                  %348 = vst [vmem:[%s338 + $0x10] sm:%s330] %v347
                  %v349 = vld [vmem:[%s337 + $0x3c] sm:%s330]
                  %350 = vst [vmem:[%s338 + $0x14] sm:%s330] %v349
                  %v351 = vld [vmem:[%s337 + $0x48] sm:%s330]
                  %352 = vst [vmem:[%s338 + $0x18] sm:%s330] %v351
                $region83: #{tpu_custom_call.1} parent=70 // loop_footer
                  %s336 = sadd.s32 1, %s332
                $region84: #{tpu_custom_call.1} parent=70 // loop_footer_branch
                  %331 = sbr.rel target = $region80
                $region85: #{tpu_custom_call.1} parent=70 // loop_exit
                  _
              $region71: #{tpu_custom_call.1} parent=55 // pred_fallthru
                _
            $region56: #{tpu_custom_call.1} parent=51 // pred_fallthru
              _
            // Predicated region
            $region57: #{tpu_custom_call.1} parent=51 // pred_check
              _
            $region58: #{tpu_custom_call.1} parent=51 // pred_check_branch
              %294 = sbr.rel (0) target = $region60
            $region59: #{tpu_custom_call.1} parent=51 // pred_region
              %s296 = ssub.s32 16, 1
              loop: start=0, step=1, limit=1
              $region61: #{tpu_custom_call.1} parent=59 // loop_pre_header
                _
              $region62: #{tpu_custom_call.1} parent=59 // loop_header
                %s298 = sphi 0, %s302
                %p299 = scmp.ge.s32.totalorder %s298, 1
                %s303 = sphi %s288, %s288
                %s304 = sphi %s286, %s286
              $region63: #{tpu_custom_call.1} parent=59 // loop_header_branch
                %301 = sbr.rel (%p299) target = $region67
              $region64: #{tpu_custom_call.1} parent=59 // loop_body
                %v305 = vld [vmem:[%s303] sm:%s296]
                %306 = vst [vmem:[%s304] sm:%s296] %v305
                %v307 = vld [vmem:[%s303 + $0xc] sm:%s296]
                %308 = vst [vmem:[%s304 + $0x4] sm:%s296] %v307
                %v309 = vld [vmem:[%s303 + $0x18] sm:%s296]
                %310 = vst [vmem:[%s304 + $0x8] sm:%s296] %v309
                %v311 = vld [vmem:[%s303 + $0x24] sm:%s296]
                %312 = vst [vmem:[%s304 + $0xc] sm:%s296] %v311
                %v313 = vld [vmem:[%s303 + $0x30] sm:%s296]
                %314 = vst [vmem:[%s304 + $0x10] sm:%s296] %v313
                %v315 = vld [vmem:[%s303 + $0x3c] sm:%s296]
                %316 = vst [vmem:[%s304 + $0x14] sm:%s296] %v315
                %v317 = vld [vmem:[%s303 + $0x48] sm:%s296]
                %318 = vst [vmem:[%s304 + $0x18] sm:%s296] %v317
              $region65: #{tpu_custom_call.1} parent=59 // loop_footer
                %s302 = sadd.s32 1, %s298
              $region66: #{tpu_custom_call.1} parent=59 // loop_footer_branch
                %297 = sbr.rel target = $region62
              $region67: #{tpu_custom_call.1} parent=59 // loop_exit
                _
            $region60: #{tpu_custom_call.1} parent=51 // pred_fallthru
              _
          $region52: #{tpu_custom_call.1} parent=47 // pred_fallthru
            _
          %353 = vnop
        $region48: #{tpu_custom_call.1} parent=43 // pred_fallthru
          _
      $region44: #{tpu_custom_call.1} parent=5 // pred_fallthru
        _
      %p354 = scmp.le.s32.totalorder 1, %s21
      %p355 = scmp.lt.s32.totalorder %s21, 4
      %p356 = pnand %p354, %p355
      %p357 = pneg %p356
      // Predicated region
      $region86: #{tpu_custom_call.1} parent=5 // pred_check
        _
      $region87: #{tpu_custom_call.1} parent=5 // pred_check_branch
        %359 = sbr.rel (%p356) target = $region89
      $region88: #{tpu_custom_call.1} parent=5 // pred_region
        %s360 = ssub.s32 %s21, 1
        %s361 = sand.u32 %s34, 1
        %s362 = sand.u32 %s34, 1
        %s363 = smul.addr %s362, 28
        %s364 = scalar_lea.vmem [#allocation3], %s363
        // Predicated region
        $region90: #{tpu_custom_call.1} parent=88 // pred_check
          %p365 = pneg %p47
        $region91: #{tpu_custom_call.1} parent=88 // pred_check_branch
          %367 = sbr.rel (%p365) target = $region93
        $region92: #{tpu_custom_call.1} parent=88 // pred_region
          _
        $region93: #{tpu_custom_call.1} parent=88 // pred_fallthru
          _
        // Predicated region
        $region94: #{tpu_custom_call.1} parent=88 // pred_check
          %p368 = pneg %p68
        $region95: #{tpu_custom_call.1} parent=88 // pred_check_branch
          %370 = sbr.rel (%p368) target = $region97
        $region96: #{tpu_custom_call.1} parent=88 // pred_region
          %371 = dma.done [#allocation5], 512
        $region97: #{tpu_custom_call.1} parent=88 // pred_fallthru
          _
        // Predicated region
        $region98: #{tpu_custom_call.1} parent=88 // pred_check
          %p372 = pneg %p110
        $region99: #{tpu_custom_call.1} parent=88 // pred_check_branch
          %374 = sbr.rel (%p372) target = $region101
        $region100: #{tpu_custom_call.1} parent=88 // pred_region
          %375 = dma.done [#allocation8], 256
        $region101: #{tpu_custom_call.1} parent=88 // pred_fallthru
          _
        %s376 = sand.u32 %s34, 1
        %s377 = sand.u32 %s34, 1
        %s378 = smul.addr %s377, 28
        %s379 = scalar_lea.vmem [#allocation3], %s378
        %p380 = pneg %p47
        %p381 = pneg %p44
        %p382 = pneg %p68
        %p383 = pneg %p65
        %p384 = pneg %p89
        %p385 = pneg %p86
        %p386 = pneg %p110
        %p387 = pneg %p107
        %p388 = pneg %p131
        %p389 = pneg %p128
        %p390 = pneg %p152
        %p391 = pneg %p149
        %p392 = pneg %p173
        %p393 = pneg %p170
        %p394 = pneg %p194
        %p395 = pneg %p191
        %p396 = pneg %p220
        %p397 = pneg %p217
        %s398 = sand.u32 %s207, 1
        %s399 = scalar_lea.sflag [#allocation6], %s398
        %s400 = sand.u32 %s207, 1
        %s401 = scalar_lea.vmem [#allocation9], %s400
        %v402 = vld [vmem:[%s364] sm:$0xf]
        %v403 = vld [vmem:[%s364 + $0x4] sm:$0xf]
        %v404 = vld [vmem:[%s364 + $0x8] sm:$0xf]
        %v405 = vunpack.c.l.bf16 %v402
        %v406 = vunpack.c.l.bf16 %v403
        %v407 = vunpack.c.l.bf16 %v404
        %v408 = vld [vmem:[%s364 + $0xc] sm:$0xf]
        %v409 = vld [vmem:[%s364 + $0x10] sm:$0xf]
        %v410 = vld [vmem:[%s364 + $0x14] sm:$0xf]
        %v411 = vld [vmem:[%s364 + $0x18] sm:$0xf]
        %v412 = vunpack.c.l.bf16 %v408
        %v413 = vunpack.c.l.bf16 %v409
        %v414 = vunpack.c.l.bf16 %v410
        %v415 = vunpack.c.l.bf16 %v411
        %v416 = vld [vmem:[#allocation4] sm:$0xff]
        %v417 = vld [vmem:[#allocation4 + $0x8] sm:$0xff]
        %v418 = vld [vmem:[#allocation4 + $0x10] sm:$0xff]
        %v419 = vld [vmem:[#allocation4 + $0x18] sm:$0xff]
        %v420 = vld [vmem:[%s2] sm:$0xff]
        %v421 = vld [vmem:[%s2 + $0x8] sm:$0xff]
        %v422 = vld [vmem:[%s2 + $0x10] sm:$0xff]
        %v423 = vld [vmem:[%s2 + $0x18] sm:$0xff]
        %425 = vset.pattern.permute.xlu0 0
        %426 = vperm.xlu0 %425, %v420
        %v427 = vpop.permute.xlu0 %426
        %430 = vset.pattern.permute.xlu0 0
        %431 = vperm.xlu0 %430, %v421
        %v432 = vpop.permute.xlu0 %431
        %435 = vset.pattern.permute.xlu0 0
        %436 = vperm.xlu0 %435, %v422
        %v437 = vpop.permute.xlu0 %436
        %440 = vset.pattern.permute.xlu0 0
        %441 = vperm.xlu0 %440, %v423
        %v442 = vpop.permute.xlu0 %441
        %vm444 = vcmask 261120
        %v446 = vsel %vm444, %v416, 0
        %v449 = vsel %vm444, %v417, 0
        %v452 = vsel %vm444, %v418, 0
        %v455 = vsel %vm444, %v419, 0
        %457 = vmatprep.subr.mxu0 0.0
        %458 = vmatpush1.msra.mxu0 0.0
        %459 = vmatprep.subr.mxu0 0.0
        %460 = vmatpush1.msra.mxu0 0.0
        %461 = vmatprep.subr.mxu0 0.0
        %462 = vmatpush1.msra.mxu0 0.0
        %463 = vmatprep.subr.mxu0 0.0
        %464 = vmatpush1.msra.mxu0 0.0
        %465 = vmatprep.subr.mxu0 0.0
        %466 = vmatpush1.msra.mxu0 0.0
        %467 = vmatprep.subr.mxu0 0.0
        %468 = vmatpush1.msra.mxu0 0.0
        %469 = vmatprep.subr.mxu0 0.0
        %470 = vmatpush1.msra.mxu0 0.0
        %471 = vmatprep.subr.mxu0 0.0
        %472 = vmatpush1.msra.mxu0 0.0
        %473 = vmatprep.subr.mxu0 0.0
        %474 = vmatpush1.msra.mxu0 0.0
        %475 = vmatprep.subr.mxu0 0.0
        %476 = vmatpush1.msra.mxu0 0.0
        %477 = vmatprep.subr.mxu0 0.0
        %478 = vmatpush1.msra.mxu0 0.0
        %479 = vmatprep.subr.mxu0 0.0
        %480 = vmatpush1.msra.mxu0 0.0
        %481 = vmatprep.subr.mxu0 0.0
        %482 = vmatpush1.msra.mxu0 %v415
        %483 = vmatprep.subr.mxu0 0.0
        %484 = vmatpush1.msra.mxu0 %v414
        %485 = vmatprep.subr.mxu0 0.0
        %486 = vmatpush1.msra.mxu0 %v413
        %487 = vmatprep.subr.mxu0 0.0
        %488 = vmatpush1.msra.mxu0 %v412
        %489 = vmatprep.subr.mxu0 0.0
        %490 = vmatpush2.msra.mxu0 0.0
        %491 = vmatprep.subr.mxu0 0.0
        %492 = vmatpush2.msra.mxu0 0.0
        %493 = vmatprep.subr.mxu0 0.0
        %494 = vmatpush2.msra.mxu0 0.0
        %495 = vmatprep.subr.mxu0 0.0
        %496 = vmatpush2.msra.mxu0 0.0
        %497 = vmatprep.subr.mxu0 0.0
        %498 = vmatpush2.msra.mxu0 0.0
        %499 = vmatprep.subr.mxu0 0.0
        %500 = vmatpush2.msra.mxu0 0.0
        %501 = vmatprep.subr.mxu0 0.0
        %502 = vmatpush2.msra.mxu0 0.0
        %503 = vmatprep.subr.mxu0 0.0
        %504 = vmatpush2.msra.mxu0 0.0
        %505 = vmatprep.subr.mxu0 0.0
        %506 = vmatpush2.msra.mxu0 0.0
        %507 = vmatprep.subr.mxu0 0.0
        %508 = vmatpush2.msra.mxu0 0.0
        %509 = vmatprep.subr.mxu0 0.0
        %510 = vmatpush2.msra.mxu0 0.0
        %511 = vmatprep.subr.mxu0 0.0
        %512 = vmatpush2.msra.mxu0 0.0
        %513 = vmatprep.subr.mxu0 0.0
        %514 = vmatpush2.msra.mxu0 0.0
        %515 = vmatprep.subr.mxu0 0.0
        %516 = vmatpush2.msra.mxu0 0.0
        %517 = vmatprep.subr.mxu0 0.0
        %518 = vmatpush2.msra.mxu0 0.0
        %519 = vmatprep.subr.mxu0 0.0
        %520 = vmatpush2.msra.mxu0 0.0
        %521 = vmatprep.mubr.f32.mxu0 0.0
        %522 = vmatmul.mubr.f32.gmra.mxu0 %v446
        %v523 = vpop.f32.mrf.mxu0
        %v524 = vadd.f32 %v427, %v523
        %v525 = vpop.f32.mrf.mxu0
        %526 = vmatprep.mubr.f32.mxu0 0.0
        %527 = vmatmul.mubr.f32.gmra.mxu0 %v449
        %v528 = vpop.f32.mrf.mxu0
        %v529 = vadd.f32 %v432, %v528
        %v530 = vpop.f32.mrf.mxu0
        %531 = vmatprep.mubr.f32.mxu0 0.0
        %532 = vmatmul.mubr.f32.gmra.mxu0 %v452
        %v533 = vpop.f32.mrf.mxu0
        %v534 = vadd.f32 %v437, %v533
        %v535 = vpop.f32.mrf.mxu0
        %536 = vmatprep.mubr.f32.mxu0 0.0
        %537 = vmatmul.mubr.f32.gmra.mxu0 %v455
        %v538 = vpop.f32.mrf.mxu0
        %v539 = vadd.f32 %v442, %v538
        %v540 = vpop.f32.mrf.mxu0
        %541 = vdwg.mxu0
        %v542 = vmax.f32 %v524, 0.0
        %v543 = vmax.f32 %v529, 0.0
        %v544 = vmax.f32 %v534, 0.0
        %v545 = vmax.f32 %v539, 0.0
        %v546 = vld [vmem:[#allocation7] sm:$0xff]
        %v547 = vld [vmem:[#allocation7 + $0x8] sm:$0xff]
        %v548 = vld [vmem:[%s4] sm:$0xff]
        %v549 = vld [vmem:[%s4 + $0x8] sm:$0xff]
        %551 = vset.pattern.permute.xlu0 0
        %552 = vperm.xlu0 %551, %v548
        %v553 = vpop.permute.xlu0 %552
        %556 = vset.pattern.permute.xlu0 0
        %557 = vperm.xlu0 %556, %v549
        %v558 = vpop.permute.xlu0 %557
        %v561 = vsel %vm444, %v546, 0
        %v564 = vsel %vm444, %v547, 0
        %566 = vmatprep.subr.mxu0 0.0
        %567 = vmatpush1.msra.mxu0 0.0
        %568 = vmatprep.subr.mxu0 0.0
        %569 = vmatpush1.msra.mxu0 0.0
        %570 = vmatprep.subr.mxu0 0.0
        %571 = vmatpush1.msra.mxu0 0.0
        %572 = vmatprep.subr.mxu0 0.0
        %573 = vmatpush1.msra.mxu0 0.0
        %574 = vmatprep.subr.mxu0 0.0
        %575 = vmatpush1.msra.mxu0 0.0
        %576 = vmatprep.subr.mxu0 0.0
        %577 = vmatpush1.msra.mxu0 0.0
        %578 = vmatprep.subr.mxu0 0.0
        %579 = vmatpush1.msra.mxu0 0.0
        %580 = vmatprep.subr.mxu0 0.0
        %581 = vmatpush1.msra.mxu0 0.0
        %582 = vmatprep.subr.mxu0 0.0
        %583 = vmatpush1.msra.mxu0 0.0
        %584 = vmatprep.subr.mxu0 0.0
        %585 = vmatpush1.msra.mxu0 0.0
        %586 = vmatprep.subr.mxu0 0.0
        %587 = vmatpush1.msra.mxu0 0.0
        %588 = vmatprep.subr.mxu0 0.0
        %589 = vmatpush1.msra.mxu0 0.0
        %590 = vmatprep.subr.mxu0 0.0
        %591 = vmatpush1.msra.mxu0 %v545
        %592 = vmatprep.subr.mxu0 0.0
        %593 = vmatpush1.msra.mxu0 %v544
        %594 = vmatprep.subr.mxu0 0.0
        %595 = vmatpush1.msra.mxu0 %v543
        %596 = vmatprep.subr.mxu0 0.0
        %597 = vmatpush1.msra.mxu0 %v542
        %598 = vmatprep.subr.mxu0 0.0
        %599 = vmatpush2.msra.mxu0 0.0
        %600 = vmatprep.subr.mxu0 0.0
        %601 = vmatpush2.msra.mxu0 0.0
        %602 = vmatprep.subr.mxu0 0.0
        %603 = vmatpush2.msra.mxu0 0.0
        %604 = vmatprep.subr.mxu0 0.0
        %605 = vmatpush2.msra.mxu0 0.0
        %606 = vmatprep.subr.mxu0 0.0
        %607 = vmatpush2.msra.mxu0 0.0
        %608 = vmatprep.subr.mxu0 0.0
        %609 = vmatpush2.msra.mxu0 0.0
        %610 = vmatprep.subr.mxu0 0.0
        %611 = vmatpush2.msra.mxu0 0.0
        %612 = vmatprep.subr.mxu0 0.0
        %613 = vmatpush2.msra.mxu0 0.0
        %614 = vmatprep.subr.mxu0 0.0
        %615 = vmatpush2.msra.mxu0 0.0
        %616 = vmatprep.subr.mxu0 0.0
        %617 = vmatpush2.msra.mxu0 0.0
        %618 = vmatprep.subr.mxu0 0.0
        %619 = vmatpush2.msra.mxu0 0.0
        %620 = vmatprep.subr.mxu0 0.0
        %621 = vmatpush2.msra.mxu0 0.0
        %622 = vmatprep.subr.mxu0 0.0
        %623 = vmatpush2.msra.mxu0 0.0
        %624 = vmatprep.subr.mxu0 0.0
        %625 = vmatpush2.msra.mxu0 0.0
        %626 = vmatprep.subr.mxu0 0.0
        %627 = vmatpush2.msra.mxu0 0.0
        %628 = vmatprep.subr.mxu0 0.0
        %629 = vmatpush2.msra.mxu0 0.0
        %630 = vmatprep.mubr.f32.mxu0 0.0
        %631 = vmatmul.mubr.f32.gmra.mxu0 %v561
        %v632 = vpop.f32.mrf.mxu0
        %v633 = vadd.f32 %v553, %v632
        %v634 = vpop.f32.mrf.mxu0
        %635 = vmatprep.mubr.f32.mxu0 0.0
        %636 = vmatmul.mubr.f32.gmra.mxu0 %v564
        %v637 = vpop.f32.mrf.mxu0
        %v638 = vadd.f32 %v558, %v637
        %v639 = vpop.f32.mrf.mxu0
        %640 = vdwg.mxu0
        %v641 = vmax.f32 %v633, 0.0
        %v642 = vmax.f32 %v638, 0.0
        %v643 = vld [vmem:[%s5] sm:$0xff]
        %v644 = vld [vmem:[%s5 + $0x8] sm:$0xff]
        %v645 = vld [vmem:[%s5 + $0x10] sm:$0xff]
        %647 = vset.pattern.permute.xlu0 0
        %648 = vperm.xlu0 %647, %v643
        %v649 = vpop.permute.xlu0 %648
        %652 = vset.pattern.permute.xlu0 0
        %653 = vperm.xlu0 %652, %v644
        %v654 = vpop.permute.xlu0 %653
        %657 = vset.pattern.permute.xlu0 0
        %658 = vperm.xlu0 %657, %v645
        %v659 = vpop.permute.xlu0 %658
        %v661 = vmul.f32 %v405, %v649
        %v662 = vmul.f32 %v406, %v654
        %v663 = vmul.f32 %v407, %v659
        %v664 = vadd.f32 %v661, %v662
        %v665 = vadd.f32 %v664, %v663
        %v666 = vrot.slane %v665, 4
        %v667 = vadd.f32 %v665, %v666
        %v668 = vrot.slane %v667, 2
        %v669 = vadd.f32 %v667, %v668
        %v670 = vrot.slane %v669, 1
        %v671 = vadd.f32 %v669, %v670
        %v672 = vld [vmem:[%s6] sm:$0xff]
        %v673 = vld [vmem:[%s6 + $0x8] sm:$0xff]
        %675 = vset.pattern.permute.xlu0 0
        %676 = vperm.xlu0 %675, %v672
        %v677 = vpop.permute.xlu0 %676
        %680 = vset.pattern.permute.xlu0 0
        %681 = vperm.xlu0 %680, %v673
        %v682 = vpop.permute.xlu0 %681
        %v684 = vmul.f32 %v641, %v677
        %v685 = vmul.f32 %v642, %v682
        %v686 = vadd.f32 %v684, %v685
        %v687 = vrot.slane %v686, 4
        %v688 = vadd.f32 %v686, %v687
        %v689 = vrot.slane %v688, 2
        %v690 = vadd.f32 %v688, %v689
        %v691 = vrot.slane %v690, 1
        %v692 = vadd.f32 %v690, %v691
        %v693 = vadd.f32 %v671, %v692
        %v694 = vld [vmem:[#allocation2] sm:$0x1]
        %696 = vset.pattern.permute.xlu0 0
        %697 = vperm.xlu0 %696, %v694
        %v698 = vpop.permute.xlu0 %697
        %v700 = vlaneseq
        %v701 = vshrl.u32 %v700, 7
        %v702 = vsub.s32 0, %v701
        %v703 = vrot.slane %v698, %v702
        %v704 = vadd.f32 %v693, %v703
        %v705 = vsub.f32 0.0, %v704
        %v706 = vmul.f32 %v705, 1.442695
        %v707 = vpow.pop %v706
        %v708 = vadd.f32 %v707, 1.0
        %v709 = vrcp.pop %v708
        %710 = vst [vmem:[%s401] sm:$0x1] %v709
        %s711 = sand.u32 %s207, 1
        %s712 = scalar_lea.sflag [#allocation6], %s711
        %s713 = sand.u32 %s207, 1
        %s714 = scalar_lea.vmem [#allocation9], %s713
        // Predicated region
        $region102: #{tpu_custom_call.1} parent=88 // pred_check
          %p715 = pneg %p217
        $region103: #{tpu_custom_call.1} parent=88 // pred_check_branch
          %717 = sbr.rel (%p715) target = $region105
        $region104: #{tpu_custom_call.1} parent=88 // pred_region
          %s719 = ssub.s32 16, 16
          %720 = vsyncadd %s712, %s719
          %s721 = smul.addr %s26, 16
          %s722 = scalar_lea.hbm %s8, %s721
          %s724 = sshll.u32 %s714, 4
          %s725 = int_to_ptr.vmem [resolvable:$true] %s724
          %727 = dma.vmem_to_hbm [thread:$0]  %s725, 16, %s722, %s712
        $region105: #{tpu_custom_call.1} parent=88 // pred_fallthru
          _
      $region89: #{tpu_custom_call.1} parent=5 // pred_fallthru
        _
      %p728 = scmp.le.s32.totalorder 2, %s21
      // Predicated region
      $region106: #{tpu_custom_call.1} parent=5 // pred_check
        %p729 = pneg %p728
      $region107: #{tpu_custom_call.1} parent=5 // pred_check_branch
        %731 = sbr.rel (%p729) target = $region109
      $region108: #{tpu_custom_call.1} parent=5 // pred_region
        %s732 = ssub.s32 %s21, 2
        // Predicated region
        $region110: #{tpu_custom_call.1} parent=108 // pred_check
          %p733 = pneg %p223
        $region111: #{tpu_custom_call.1} parent=108 // pred_check_branch
          %735 = sbr.rel (%p733) target = $region113
        $region112: #{tpu_custom_call.1} parent=108 // pred_region
          %s736 = sand.u32 %s208, 1
          %s737 = scalar_lea.sflag [#allocation6], %s736
          %s738 = sand.u32 %s208, 1
          %s739 = scalar_lea.vmem [#allocation9], %s738
          %740 = dma.done %s737, 16
        $region113: #{tpu_custom_call.1} parent=108 // pred_fallthru
          _
      $region109: #{tpu_custom_call.1} parent=5 // pred_fallthru
        _
    $region6: #{tpu_custom_call.1} parent=1 // loop_footer
      %s25 = sadd.s32 1, %s21
    $region7: #{tpu_custom_call.1} parent=1 // loop_footer_branch
      %20 = sbr.rel target = $region3
    $region8: #{tpu_custom_call.1} parent=1 // loop_exit
      _
    %741 = vsyncpa [#allocation5], 1
    %s742 = scalar_lea.sflag [#allocation5], 1
    %743 = vsyncpa %s742, 1
    %744 = vsyncpa [#allocation8], 1
    %745 = vsyncpa [#allocation6], 1
    %s746 = scalar_lea.sflag [#allocation6], 1
    %747 = vsyncpa %s746, 1

</llo_original>
